<compile_context>
chip_gen: v6e
topology: v6e:2x2x1
jax: 0.10.0
libtpu: 0.0.40
codegen_flags: <defaults>
</compile_context>

<pallas_src>
import functools
import jax
import jax.numpy as jnp
from jax.experimental import pallas as pl
from jax.experimental.pallas import tpu as pltpu


def _round_up(x, m):
    return (x + m - 1) // m * m


def _pick_tile(total, candidates):
    for c in candidates:
        if c <= total and total % c == 0:
            return c
    return total


# --------------------------------------------------------------------------
# Fused MoCo forward kernel: both encoders (GAP folded into matmul) + bias +
# L2-normalize + 1/T scale + l_neg = (q_norm/T) @ queue, all in one kernel.
# --------------------------------------------------------------------------
def _moco_fwd_kernel(xq_ref, xk_ref, wq_ref, wk_ref, bq_ref, bk_ref,
                     queue_ref, qs_ref, kn_ref, lneg_ref, *, inv_T):
    c = pl.program_id(1)

    @pl.when(c == 0)
    def _():
        qs_ref[...] = jnp.zeros_like(qs_ref)
        kn_ref[...] = jnp.zeros_like(kn_ref)

    # Accumulate directly into the resident f32 output blocks (no scratch).
    qs_ref[...] += jnp.dot(xq_ref[...], wq_ref[...],
                           preferred_element_type=jnp.float32)
    kn_ref[...] += jnp.dot(xk_ref[...], wk_ref[...],
                           preferred_element_type=jnp.float32)

    @pl.when(c == pl.num_programs(1) - 1)
    def _():
        q = qs_ref[...] + bq_ref[...]
        k = kn_ref[...] + bk_ref[...]
        # F.normalize(dim=1): x / max(||x||, 1e-12) == x * rsqrt(max(s, 1e-24))
        q_inv = jax.lax.rsqrt(
            jnp.maximum(jnp.sum(q * q, axis=-1, keepdims=True), 1e-24))
        k_inv = jax.lax.rsqrt(
            jnp.maximum(jnp.sum(k * k, axis=-1, keepdims=True), 1e-24))
        q_scaled = q * (q_inv * inv_T)      # q_norm / T
        qs_ref[...] = q_scaled
        kn_ref[...] = k * k_inv             # k_norm (still batch-shuffled)
        # l_neg for this row block, straight from VMEM-resident q (MXU).
        lneg_ref[...] = jnp.dot(q_scaled, queue_ref[...],
                                preferred_element_type=jnp.float32)


def moco_fused_forward(xq_flat, xk_flat, wq, wk, bq, bk, queue, inv_T):
    n, chw = xq_flat.shape
    d_pad = wq.shape[1]
    k_total = queue.shape[1]
    tn = _pick_tile(n, (128, 64, 32, 16, 8))
    # Modest reduction tiles so the double-buffered input blocks fit v7x's
    # 64 MiB VMEM comfortably even when C*H*W grows; queue and l_neg blocks
    # are resident across the reduction axis (constant index maps).
    tc = _pick_tile(chw, (512, 256, 128))
    grid = (n // tn, chw // tc)
    kern = functools.partial(_moco_fwd_kernel, inv_T=float(inv_T))
    return pl.pallas_call(
        kern,
        grid=grid,
        in_specs=[
            pl.BlockSpec((tn, tc), lambda i, c: (i, c)),          # xq
            pl.BlockSpec((tn, tc), lambda i, c: (i, c)),          # xk (shuffled)
            pl.BlockSpec((tc, d_pad), lambda i, c: (c, 0)),       # wq (GAP-folded)
            pl.BlockSpec((tc, d_pad), lambda i, c: (c, 0)),       # wk (GAP-folded)
            pl.BlockSpec((1, d_pad), lambda i, c: (0, 0)),        # bq (constant)
            pl.BlockSpec((1, d_pad), lambda i, c: (0, 0)),        # bk (constant)
            pl.BlockSpec((d_pad, k_total), lambda i, c: (0, 0)),  # queue (constant)
        ],
        out_specs=(
            pl.BlockSpec((tn, d_pad), lambda i, c: (i, 0)),       # q_norm / T
            pl.BlockSpec((tn, d_pad), lambda i, c: (i, 0)),       # k_norm (shuffled)
            pl.BlockSpec((tn, k_total), lambda i, c: (i, 0)),     # l_neg
        ),
        out_shape=(
            jax.ShapeDtypeStruct((n, d_pad), jnp.float32),
            jax.ShapeDtypeStruct((n, d_pad), jnp.float32),
            jax.ShapeDtypeStruct((n, k_total), jnp.float32),
        ),
        compiler_params=pltpu.CompilerParams(
            dimension_semantics=("parallel", "arbitrary")),
    )(xq_flat, xk_flat, wq, wk, bq, bk, queue)


# --------------------------------------------------------------------------
# Queue enqueue: write only the (D, n) slab at the dynamic pointer.  The
# queue stays in HBM (pl.ANY) and is aliased input->output; the new keys are
# DMA'd into queue[:, ptr:ptr+n] directly.
# --------------------------------------------------------------------------
def _enqueue_kernel(knT_ref, ptr_ref, queue_in_ref, queue_out_ref, sem):
    del queue_in_ref                       # same HBM buffer as queue_out_ref
    n = knT_ref.shape[1]
    cp = pltpu.make_async_copy(
        knT_ref, queue_out_ref.at[:, pl.ds(ptr_ref[0], n)], sem)
    cp.start()
    cp.wait()


def queue_enqueue(queue, kn, ptr):
    d_pad, k_total = queue.shape
    knT = jnp.transpose(kn)                # (d_pad, n) — tiny wrapper transpose
    ptr_arr = jnp.asarray([ptr], dtype=jnp.int32)
    return pl.pallas_call(
        _enqueue_kernel,
        in_specs=[
            pl.BlockSpec(memory_space=pltpu.MemorySpace.VMEM),   # kn.T
            pl.BlockSpec(memory_space=pltpu.MemorySpace.SMEM),   # ptr
            pl.BlockSpec(memory_space=pl.ANY),                   # queue (aliased)
        ],
        out_specs=pl.BlockSpec(memory_space=pl.ANY),
        out_shape=jax.ShapeDtypeStruct((d_pad, k_total), jnp.float32),
        scratch_shapes=[pltpu.SemaphoreType.DMA],
        input_output_aliases={2: 0},
        compiler_params=pltpu.CompilerParams(has_side_effects=True),
    )(knT, ptr_arr, queue)


# --------------------------------------------------------------------------
# Functional ModelMoCo (state held on the Python object, updated in forward).
# --------------------------------------------------------------------------
class ModelMoCoJax:
    def __init__(self, key, in_channels=4, spatial=(16, 16), dim=32, K=64,
                 m=0.99, T=0.1):
        self.K, self.m, self.T, self.dim = K, m, T, dim
        self.d_pad = _round_up(dim, 128)
        self.hw = spatial[0] * spatial[1]
        k1, k2 = jax.random.split(key)
        w0 = jax.random.normal(k1, (in_channels, dim), jnp.float32) * 0.05
        w_pad = jnp.zeros((in_channels, self.d_pad), jnp.float32).at[:, :dim].set(w0)
        b_pad = jnp.zeros((1, self.d_pad), jnp.float32)
        self.params_q = {"w": w_pad, "b": b_pad}
        # key encoder starts as a copy of the query encoder (as in __init__)
        self.params_k = {"w": w_pad, "b": b_pad}
        q0 = jax.random.normal(k2, (dim, K), jnp.float32)
        q0 = q0 / jnp.maximum(jnp.sqrt(jnp.sum(q0 * q0, axis=0, keepdims=True)),
                              1e-12)
        self.queue = jnp.zeros((self.d_pad, K), jnp.float32).at[:dim, :].set(q0)
        self.queue_ptr = 0

    def forward(self, im_q, im_k, shuffle_key):
        n, c, h, w = im_q.shape
        hw = h * w
        m = self.m

        # momentum update of key encoder (torch.no_grad in PyTorch)
        self.params_k = {
            name: self.params_k[name] * m + self.params_q[name] * (1.0 - m)
            for name in self.params_q
        }

        # batch shuffle for the key encoder (BN trick); row-wise normalization
        # inside the encoder epilogue commutes with the row permutation.
        idx_shuffle = jax.random.permutation(shuffle_key, n)
        idx_unshuffle = jnp.argsort(idx_shuffle)
        im_k_ = im_k[idx_shuffle]

        # Fold the global average pool into the head matmul:
        # mean_{h,w}(x) @ W  ==  x_flat @ (repeat(W, HW, axis=0) / HW)
        xq = im_q.reshape(n, c * hw)
        xk = im_k_.reshape(n, c * hw)
        wq_fold = jnp.repeat(self.params_q["w"], hw, axis=0) * (1.0 / hw)
        wk_fold = jnp.repeat(self.params_k["w"], hw, axis=0) * (1.0 / hw)

        # One fused kernel: both encoders + normalize + 1/T scale + l_neg.
        # (l_neg uses the pre-enqueue queue, matching queue.clone().detach().)
        qs, kn_shuf, l_neg = moco_fused_forward(
            xq, xk, wq_fold, wk_fold,
            self.params_q["b"], self.params_k["b"], self.queue, 1.0 / self.T)
        kn = kn_shuf[idx_unshuffle]

        # l_pos = <q_norm, k_norm>/T (1/T already folded into qs); the width-1
        # column and the concat stay in the XLA wrapper so kernel outputs are
        # lane-dense.
        l_pos = jnp.sum(qs * kn, axis=1, keepdims=True)
        logits = jnp.concatenate([l_pos, l_neg], axis=1)
        labels = jnp.zeros((n,), dtype=jnp.int32)  # torch.long -> int32 (x32)

        # dequeue & enqueue: only the (D, n) slab is written in-place.
        assert self.K % n == 0
        ptr = int(self.queue_ptr)
        self.queue = queue_enqueue(self.queue, kn, ptr)
        self.queue_ptr = (ptr + n) % self.K

        return logits, labels


if __name__ == "__main__":
    key = jax.random.PRNGKey(0)
    k_model, k_q, k_k, k_shuf = jax.random.split(key, 4)

    N, C, H, W = 8, 4, 16, 16
    DIM, K_QUEUE = 32, 64

    model = ModelMoCoJax(k_model, in_channels=C, spatial=(H, W),
                         dim=DIM, K=K_QUEUE, m=0.99, T=0.1)

    im_q = jax.random.normal(k_q, (N, C, H, W), jnp.float32)
    im_k = jax.random.normal(k_k, (N, C, H, W), jnp.float32)

    logits, labels = model.forward(im_q, im_k, k_shuf)
    logits = jax.block_until_ready(logits)
    labels = jax.block_until_ready(labels)
    jax.block_until_ready(model.queue)

    assert logits.shape == (N, 1 + K_QUEUE)
    assert labels.shape == (N,)
    assert bool(jnp.all(jnp.isfinite(logits)))
    print("KERNEL_OK")
</pallas_src>

<mosaic_0001>
module attributes {stable_mosaic.version = 11 : i64} {
  func.func @_moco_fwd_kernel(%arg0: i32, %arg1: i32, %arg2: memref<8x512xf32, #tpu.memory_space<vmem>>, %arg3: memref<8x512xf32, #tpu.memory_space<vmem>>, %arg4: memref<512x128xf32, #tpu.memory_space<vmem>>, %arg5: memref<512x128xf32, #tpu.memory_space<vmem>>, %arg6: memref<1x128xf32, #tpu.memory_space<vmem>>, %arg7: memref<1x128xf32, #tpu.memory_space<vmem>>, %arg8: memref<128x64xf32, #tpu.memory_space<vmem>>, %arg9: memref<8x128xf32, #tpu.memory_space<vmem>>, %arg10: memref<8x128xf32, #tpu.memory_space<vmem>>, %arg11: memref<8x64xf32, #tpu.memory_space<vmem>>) attributes {dimension_semantics = [#tpu.dimension_semantics<parallel>, #tpu.dimension_semantics<arbitrary>], iteration_bounds = array<i64: 1, 2>, scalar_prefetch = 0 : i64, scratch_operands = 0 : i64, tpu.core_type = #tpu.core_type<tc>, window_params = [{transform_indices = @transform_0, window_bounds = array<i64: 8, 512>}, {transform_indices = @transform_1, window_bounds = array<i64: 8, 512>}, {transform_indices = @transform_2, window_bounds = array<i64: 512, 128>}, {transform_indices = @transform_3, window_bounds = array<i64: 512, 128>}, {pipeline_mode = #tpu.pipeline_mode<synchronous>, transform_indices = @transform_4, window_bounds = array<i64: 1, 128>}, {pipeline_mode = #tpu.pipeline_mode<synchronous>, transform_indices = @transform_5, window_bounds = array<i64: 1, 128>}, {pipeline_mode = #tpu.pipeline_mode<synchronous>, transform_indices = @transform_6, window_bounds = array<i64: 128, 64>}, {transform_indices = @transform_7, window_bounds = array<i64: 8, 128>}, {transform_indices = @transform_8, window_bounds = array<i64: 8, 128>}, {transform_indices = @transform_9, window_bounds = array<i64: 8, 64>}]} {
    %c0_i32 = arith.constant 0 : i32
    %0 = arith.cmpi eq, %arg1, %c0_i32 : i32
    %1 = arith.extui %0 : i1 to i32
    %c0_i32_0 = arith.constant 0 : i32
    %2 = arith.cmpi ne, %1, %c0_i32_0 : i32
    scf.if %2 {
      %cst_18 = arith.constant 0.000000e+00 : f32
      %18 = vector.broadcast %cst_18 : f32 to vector<8x128xf32>
      %c0_19 = arith.constant 0 : index
      %c0_20 = arith.constant 0 : index
      %19 = vector.load %arg9[%c0_19, %c0_20] : memref<8x128xf32, #tpu.memory_space<vmem>>, vector<8x128xf32>
      tpu.vector_store %arg9[%c0_19, %c0_20], %18 {strides = array<i32>} : memref<8x128xf32, #tpu.memory_space<vmem>>, vector<8x128xf32>,
      %cst_21 = arith.constant 0.000000e+00 : f32
      %20 = vector.broadcast %cst_21 : f32 to vector<8x128xf32>
      %c0_22 = arith.constant 0 : index
      %c0_23 = arith.constant 0 : index
      %21 = vector.load %arg10[%c0_22, %c0_23] : memref<8x128xf32, #tpu.memory_space<vmem>>, vector<8x128xf32>
      tpu.vector_store %arg10[%c0_22, %c0_23], %20 {strides = array<i32>} : memref<8x128xf32, #tpu.memory_space<vmem>>, vector<8x128xf32>,
    } else {
    }
    %c0 = arith.constant 0 : index
    %c0_1 = arith.constant 0 : index
    %3 = vector.load %arg9[%c0, %c0_1] : memref<8x128xf32, #tpu.memory_space<vmem>>, vector<8x128xf32>
    %c0_2 = arith.constant 0 : index
    %c0_3 = arith.constant 0 : index
    %4 = vector.load %arg2[%c0_2, %c0_3] : memref<8x512xf32, #tpu.memory_space<vmem>>, vector<8x512xf32>
    %c0_4 = arith.constant 0 : index
    %c0_5 = arith.constant 0 : index
    %5 = vector.load %arg4[%c0_4, %c0_5] : memref<512x128xf32, #tpu.memory_space<vmem>>, vector<512x128xf32>
    %cst = arith.constant dense<0.000000e+00> : vector<8x128xf32>
    %6 = tpu.matmul %4, %5, %cst {dimension_numbers = #tpu.dot_dimension_numbers<[1], [0], [0], [1], [0, 0, 1, 1], [], []>} : vector<8x512xf32>, vector<512x128xf32>, vector<8x128xf32> -> vector<8x128xf32>
    %7 = arith.addf %3, %6 : vector<8x128xf32>
    %c0_6 = arith.constant 0 : index
    %c0_7 = arith.constant 0 : index
    %8 = vector.load %arg9[%c0_6, %c0_7] : memref<8x128xf32, #tpu.memory_space<vmem>>, vector<8x128xf32>
    tpu.vector_store %arg9[%c0_6, %c0_7], %7 {strides = array<i32>} : memref<8x128xf32, #tpu.memory_space<vmem>>, vector<8x128xf32>,
    %c0_8 = arith.constant 0 : index
    %c0_9 = arith.constant 0 : index
    %9 = vector.load %arg10[%c0_8, %c0_9] : memref<8x128xf32, #tpu.memory_space<vmem>>, vector<8x128xf32>
    %c0_10 = arith.constant 0 : index
    %c0_11 = arith.constant 0 : index
    %10 = vector.load %arg3[%c0_10, %c0_11] : memref<8x512xf32, #tpu.memory_space<vmem>>, vector<8x512xf32>
    %c0_12 = arith.constant 0 : index
    %c0_13 = arith.constant 0 : index
    %11 = vector.load %arg5[%c0_12, %c0_13] : memref<512x128xf32, #tpu.memory_space<vmem>>, vector<512x128xf32>
    %cst_14 = arith.constant dense<0.000000e+00> : vector<8x128xf32>
    %12 = tpu.matmul %10, %11, %cst_14 {dimension_numbers = #tpu.dot_dimension_numbers<[1], [0], [0], [1], [0, 0, 1, 1], [], []>} : vector<8x512xf32>, vector<512x128xf32>, vector<8x128xf32> -> vector<8x128xf32>
    %13 = arith.addf %9, %12 : vector<8x128xf32>
    %c0_15 = arith.constant 0 : index
    %c0_16 = arith.constant 0 : index
    %14 = vector.load %arg10[%c0_15, %c0_16] : memref<8x128xf32, #tpu.memory_space<vmem>>, vector<8x128xf32>
    tpu.vector_store %arg10[%c0_15, %c0_16], %13 {strides = array<i32>} : memref<8x128xf32, #tpu.memory_space<vmem>>, vector<8x128xf32>,
    %c1_i32 = arith.constant 1 : i32
    %15 = arith.cmpi eq, %arg1, %c1_i32 : i32
    %16 = arith.extui %15 : i1 to i32
    %c0_i32_17 = arith.constant 0 : i32
    %17 = arith.cmpi ne, %16, %c0_i32_17 : i32
    scf.if %17 {
      %c0_18 = arith.constant 0 : index
      %c0_19 = arith.constant 0 : index
      %18 = vector.load %arg9[%c0_18, %c0_19] : memref<8x128xf32, #tpu.memory_space<vmem>>, vector<8x128xf32>
      %c0_20 = arith.constant 0 : index
      %c0_21 = arith.constant 0 : index
      %19 = vector.load %arg6[%c0_20, %c0_21] : memref<1x128xf32, #tpu.memory_space<vmem>>, vector<1x128xf32>
      %20 = vector.broadcast %19 : vector<1x128xf32> to vector<8x128xf32>
      %21 = arith.addf %18, %20 : vector<8x128xf32>
      %c0_22 = arith.constant 0 : index
      %c0_23 = arith.constant 0 : index
      %22 = vector.load %arg10[%c0_22, %c0_23] : memref<8x128xf32, #tpu.memory_space<vmem>>, vector<8x128xf32>
      %c0_24 = arith.constant 0 : index
      %c0_25 = arith.constant 0 : index
      %23 = vector.load %arg7[%c0_24, %c0_25] : memref<1x128xf32, #tpu.memory_space<vmem>>, vector<1x128xf32>
      %24 = vector.broadcast %23 : vector<1x128xf32> to vector<8x128xf32>
      %25 = arith.addf %22, %24 : vector<8x128xf32>
      %26 = arith.mulf %21, %21 : vector<8x128xf32>
      %cst_26 = arith.constant dense<0.000000e+00> : vector<8xf32>
      %27 = vector.multi_reduction <add>, %26, %cst_26 [1] : vector<8x128xf32> to vector<8xf32>
      %28 = vector.shape_cast %27 : vector<8xf32> to vector<8x1xf32>
      %cst_27 = arith.constant 1.000000e-24 : f32
      %29 = vector.broadcast %cst_27 : f32 to vector<8x1xf32>
      %30 = arith.maximumf %28, %29 : vector<8x1xf32>
      %31 = math.rsqrt %30 : vector<8x1xf32>
      %32 = arith.mulf %25, %25 : vector<8x128xf32>
      %cst_28 = arith.constant dense<0.000000e+00> : vector<8xf32>
      %33 = vector.multi_reduction <add>, %32, %cst_28 [1] : vector<8x128xf32> to vector<8xf32>
      %34 = vector.shape_cast %33 : vector<8xf32> to vector<8x1xf32>
      %cst_29 = arith.constant 1.000000e-24 : f32
      %35 = vector.broadcast %cst_29 : f32 to vector<8x1xf32>
      %36 = arith.maximumf %34, %35 : vector<8x1xf32>
      %37 = math.rsqrt %36 : vector<8x1xf32>
      %cst_30 = arith.constant 1.000000e+01 : f32
      %38 = vector.broadcast %cst_30 : f32 to vector<8x1xf32>
      %39 = arith.mulf %31, %38 : vector<8x1xf32>
      %40 = vector.broadcast %39 : vector<8x1xf32> to vector<8x128xf32>
      %41 = arith.mulf %21, %40 : vector<8x128xf32>
      %c0_31 = arith.constant 0 : index
      %c0_32 = arith.constant 0 : index
      %42 = vector.load %arg9[%c0_31, %c0_32] : memref<8x128xf32, #tpu.memory_space<vmem>>, vector<8x128xf32>
      tpu.vector_store %arg9[%c0_31, %c0_32], %41 {strides = array<i32>} : memref<8x128xf32, #tpu.memory_space<vmem>>, vector<8x128xf32>,
      %43 = vector.broadcast %37 : vector<8x1xf32> to vector<8x128xf32>
      %44 = arith.mulf %25, %43 : vector<8x128xf32>
      %c0_33 = arith.constant 0 : index
      %c0_34 = arith.constant 0 : index
      %45 = vector.load %arg10[%c0_33, %c0_34] : memref<8x128xf32, #tpu.memory_space<vmem>>, vector<8x128xf32>
      tpu.vector_store %arg10[%c0_33, %c0_34], %44 {strides = array<i32>} : memref<8x128xf32, #tpu.memory_space<vmem>>, vector<8x128xf32>,
      %c0_35 = arith.constant 0 : index
      %c0_36 = arith.constant 0 : index
      %46 = vector.load %arg8[%c0_35, %c0_36] : memref<128x64xf32, #tpu.memory_space<vmem>>, vector<128x64xf32>
      %cst_37 = arith.constant dense<0.000000e+00> : vector<8x64xf32>
      %47 = tpu.matmul %41, %46, %cst_37 {dimension_numbers = #tpu.dot_dimension_numbers<[1], [0], [0], [1], [0, 0, 1, 1], [], []>} : vector<8x128xf32>, vector<128x64xf32>, vector<8x64xf32> -> vector<8x64xf32>
      %c0_38 = arith.constant 0 : index
      %c0_39 = arith.constant 0 : index
      %48 = vector.load %arg11[%c0_38, %c0_39] : memref<8x64xf32, #tpu.memory_space<vmem>>, vector<8x64xf32>
      tpu.vector_store %arg11[%c0_38, %c0_39], %47 {strides = array<i32>} : memref<8x64xf32, #tpu.memory_space<vmem>>, vector<8x64xf32>,
    } else {
    }
    return
  }
  func.func @transform_0(%arg0: i32, %arg1: i32) -> (i32, i32) {
    %c0_i32 = arith.constant 0 : i32
    return %arg0, %arg1 : i32, i32
  }
  func.func @transform_1(%arg0: i32, %arg1: i32) -> (i32, i32) {
    %c0_i32 = arith.constant 0 : i32
    return %arg0, %arg1 : i32, i32
  }
  func.func @transform_2(%arg0: i32, %arg1: i32) -> (i32, i32) {
    %c0_i32 = arith.constant 0 : i32
    %c0_i32_0 = arith.constant 0 : i32
    return %arg1, %c0_i32 : i32, i32
  }
  func.func @transform_3(%arg0: i32, %arg1: i32) -> (i32, i32) {
    %c0_i32 = arith.constant 0 : i32
    %c0_i32_0 = arith.constant 0 : i32
    return %arg1, %c0_i32 : i32, i32
  }
  func.func @transform_4(%arg0: i32, %arg1: i32) -> (i32, i32) {
    %c0_i32 = arith.constant 0 : i32
    %c0_i32_0 = arith.constant 0 : i32
    %c0_i32_1 = arith.constant 0 : i32
    return %c0_i32, %c0_i32_0 : i32, i32
  }
  func.func @transform_5(%arg0: i32, %arg1: i32) -> (i32, i32) {
    %c0_i32 = arith.constant 0 : i32
    %c0_i32_0 = arith.constant 0 : i32
    %c0_i32_1 = arith.constant 0 : i32
    return %c0_i32, %c0_i32_0 : i32, i32
  }
  func.func @transform_6(%arg0: i32, %arg1: i32) -> (i32, i32) {
    %c0_i32 = arith.constant 0 : i32
    %c0_i32_0 = arith.constant 0 : i32
    %c0_i32_1 = arith.constant 0 : i32
    return %c0_i32, %c0_i32_0 : i32, i32
  }
  func.func @transform_7(%arg0: i32, %arg1: i32) -> (i32, i32) {
    %c0_i32 = arith.constant 0 : i32
    %c0_i32_0 = arith.constant 0 : i32
    return %arg0, %c0_i32 : i32, i32
  }
  func.func @transform_8(%arg0: i32, %arg1: i32) -> (i32, i32) {
    %c0_i32 = arith.constant 0 : i32
    %c0_i32_0 = arith.constant 0 : i32
    return %arg0, %c0_i32 : i32, i32
  }
  func.func @transform_9(%arg0: i32, %arg1: i32) -> (i32, i32) {
    %c0_i32 = arith.constant 0 : i32
    %c0_i32_0 = arith.constant 0 : i32
    return %arg0, %c0_i32 : i32, i32
  }
}

</mosaic_0001>

<llo_original>
// kernel: tpu_custom_call.1
$region0: #{tpu_custom_call.1}
  #allocation0 [shape = 'u32[]', space=smem, size = 0x4, offset = 0x4, fixed_abs, tag = 'smem constant byte address 0x4 - core index']
  #allocation1 [shape = 'u32[144,128]{1,0:T(1,128)}', space=vmem, size = 0x12000, scoped, tag = 'internal scratch']
  %s0 = inlined_call_operand.vmem [shape: f32[8,1024], index: 0, kind: input, shape index: {}]
  %s1 = inlined_call_operand.vmem [shape: f32[8,1024], index: 1, kind: input, shape index: {}]
  %s2 = inlined_call_operand.hbm [shape: f32[1024,128], index: 2, kind: input, shape index: {}]
  %s3 = inlined_call_operand.hbm [shape: f32[1024,128], index: 3, kind: input, shape index: {}]
  %s4 = inlined_call_operand.vmem [shape: f32[1,128], index: 4, kind: input, shape index: {}]
  %s5 = inlined_call_operand.vmem [shape: f32[1,128], index: 5, kind: input, shape index: {}]
  %s6 = inlined_call_operand.vmem [shape: f32[128,64], index: 6, kind: input, shape index: {}]
  %s7 = inlined_call_operand.hbm [shape: f32[8,128], index: 7, kind: output, shape index: {0}]
  %s8 = inlined_call_operand.hbm [shape: f32[8,128], index: 8, kind: output, shape index: {1}]
  %s9 = inlined_call_operand.hbm [shape: f32[8,64], index: 9, kind: output, shape index: {2}]
  %10 = xla_tuple %s7, %s8, %s9
  %s11 = sld [smem:[#allocation0]]
  $region93: #{tpu_custom_call.1} parent=0
    _
  %s13 = ssub.s32 1, %s11
  %s14 = scalar_select 0, %s13, %s11
  $region1: #{tpu_custom_call.1} parent=0
    #allocation2 [shape = 'u8[524288]{0}', space=vmem, size = 0x80000, scoped, tag = 'input window, operand 2']
    #allocation3 [shape = 's32[2]{0}', space=sflag, size = 0x8, scoped, tag = 'scoped memory for tpu_custom_call.1']
    #allocation4 [shape = 's32[2]{0}', space=sflag, size = 0x8, scoped, tag = 'scoped memory for tpu_custom_call.1']
    #allocation5 [shape = 'u8[524288]{0}', space=vmem, size = 0x80000, scoped, tag = 'input window, operand 3']
    #allocation6 [shape = 's32[2]{0}', space=sflag, size = 0x8, scoped, tag = 'scoped memory for tpu_custom_call.1']
    #allocation7 [shape = 'u8[4096]{0}', space=vmem, size = 0x1000, scoped, tag = 'output window, operand 0, single buffered']
    #allocation8 [shape = 'u8[4096]{0}', space=vmem, size = 0x1000, scoped, tag = 'output window, operand 1, single buffered']
    #allocation9 [shape = 's32[1]{0}', space=sflag, size = 0x4, scoped, tag = 'scoped memory for tpu_custom_call.1']
    #allocation10 [shape = 'u8[4096]{0}', space=vmem, size = 0x1000, scoped, tag = 'output window, operand 2, single buffered']
    %15 = vsyncpa [#allocation3], 0
    %s16 = scalar_lea.sflag [#allocation3], 1
    %17 = vsyncpa %s16, 0
    %18 = vsyncpa [#allocation6], 0
    %s19 = scalar_lea.sflag [#allocation6], 1
    %20 = vsyncpa %s19, 0
    %21 = vsyncpa [#allocation4], 0
    %22 = vsyncpa [#allocation9], 0
    loop: start=0, step=1, limit=4
    $region2: #{tpu_custom_call.1} parent=1 // loop_pre_header
      _
    $region3: #{tpu_custom_call.1} parent=1 // loop_header
      %s24 = sphi 0, %s28
      %p25 = scmp.ge.s32.totalorder %s24, 4
      %s31 = sphi 0, %s43
      %s32 = sphi 0, %s39
      %s33 = sphi 0, %s31
      %s34 = sphi 0, %s32
      %s35 = sphi 0, %s33
      %s36 = sphi 0, %s34
      %s48 = sphi 0, %s50
      %s51 = sphi 0, %s48
      %s52 = sphi 0, %s51
      %s68 = sphi 0, %s52
      %s76 = sphi 0, %s78
      %s79 = sphi 0, %s76
      %s80 = sphi 0, %s79
      %s96 = sphi 0, %s80
      %s102 = sphi 0, %s104
      %s105 = sphi 0, %s102
      %s106 = sphi 0, %s105
      %s122 = sphi 0, %s106
      %s128 = sphi 0, %s130
      %s131 = sphi 0, %s128
      %s132 = sphi 0, %s131
      %s148 = sphi 0, %s132
      %s152 = sphi 0, %s152
      %s154 = sphi 0, %s152
      %s155 = sphi 0, %s154
      %s169 = sphi 0, %s155
      %s173 = sphi 0, %s173
      %s175 = sphi 0, %s173
      %s176 = sphi 0, %s175
      %s190 = sphi 0, %s176
      %s194 = sphi 0, %s194
      %s196 = sphi 0, %s194
      %s197 = sphi 0, %s196
      %s211 = sphi 0, %s197
      %s217 = sphi 0, %s219
      %s220 = sphi 0, %s217
      %s221 = sphi 0, %s220
      %s237 = sphi 0, %s221
      %s243 = sphi 0, %s245
      %s246 = sphi 0, %s243
      %s247 = sphi 0, %s246
      %s263 = sphi 0, %s247
      %s269 = sphi 0, %s271
      %s272 = sphi 0, %s269
      %s273 = sphi 0, %s272
      %s289 = sphi 0, %s273
    $region4: #{tpu_custom_call.1} parent=1 // loop_header_branch
      %27 = sbr.rel (%p25) target = $region8
    $region5: #{tpu_custom_call.1} parent=1 // loop_body
      %s29 = ssub.s32 %s24, 1
      %s30 = ssub.s32 %s24, 2
      %s37 = sadd.s32 1, %s32
      %p38 = scmp.ge.s32.totalorder %s37, 2
      %s39 = scalar_select %p38, 0, %s37
      %s40 = sadd.s32 1, %s31
      %s41 = scalar_select %p38, %s40, %s31
      %p42 = scmp.ge.s32.totalorder %s41, 1
      %s43 = scalar_select %p42, 0, %s41
      %s44 = ssub.s32 %s31, %s43
      %s45 = ssub.s32 %s32, %s39
      %s46 = sor.u32 %s44, %s45
      %p47 = scmp.eq.s32.totalorder %s46, 0
      %s49 = sadd.s32 %s48, 1
      %s50 = scalar_select %p47, %s48, %s49
      %p53 = pneg %p47
      %p54 = scmp.eq.s32.totalorder %s24, 1
      %p55 = por %p53, %p54
      %p56 = scmp.ne.s32.totalorder %s48, %s51
      %p57 = scmp.eq.s32.totalorder %s24, 0
      %p58 = por %p56, %p57
      %p59 = scmp.ne.s32.totalorder %s48, %s51
      %p60 = scmp.eq.s32.totalorder %s29, 1
      %p61 = por %p59, %p60
      %p62 = scmp.ne.s32.totalorder %s51, %s52
      %p63 = scmp.eq.s32.totalorder %s29, 0
      %p64 = por %p62, %p63
      %p65 = scmp.ne.s32.totalorder %s51, %s52
      %p66 = scmp.eq.s32.totalorder %s30, 1
      %p67 = por %p65, %p66
      %p69 = scmp.ne.s32.totalorder %s52, %s68
      %p70 = scmp.eq.s32.totalorder %s30, 0
      %p71 = por %p69, %p70
      %s72 = ssub.s32 %s31, %s43
      %s73 = ssub.s32 %s32, %s39
      %s74 = sor.u32 %s72, %s73
      %p75 = scmp.eq.s32.totalorder %s74, 0
      %s77 = sadd.s32 %s76, 1
      %s78 = scalar_select %p75, %s76, %s77
      %p81 = pneg %p75
      %p82 = scmp.eq.s32.totalorder %s24, 1
      %p83 = por %p81, %p82
      %p84 = scmp.ne.s32.totalorder %s76, %s79
      %p85 = scmp.eq.s32.totalorder %s24, 0
      %p86 = por %p84, %p85
      %p87 = scmp.ne.s32.totalorder %s76, %s79
      %p88 = scmp.eq.s32.totalorder %s29, 1
      %p89 = por %p87, %p88
      %p90 = scmp.ne.s32.totalorder %s79, %s80
      %p91 = scmp.eq.s32.totalorder %s29, 0
      %p92 = por %p90, %p91
      %p93 = scmp.ne.s32.totalorder %s79, %s80
      %p94 = scmp.eq.s32.totalorder %s30, 1
      %p95 = por %p93, %p94
      %p97 = scmp.ne.s32.totalorder %s80, %s96
      %p98 = scmp.eq.s32.totalorder %s30, 0
      %p99 = por %p97, %p98
      %s100 = ssub.s32 %s32, %s39
      %p101 = scmp.eq.s32.totalorder %s100, 0
      %s103 = sadd.s32 %s102, 1
      %s104 = scalar_select %p101, %s102, %s103
      %p107 = pneg %p101
      %p108 = scmp.eq.s32.totalorder %s24, 1
      %p109 = por %p107, %p108
      %p110 = scmp.ne.s32.totalorder %s102, %s105
      %p111 = scmp.eq.s32.totalorder %s24, 0
      %p112 = por %p110, %p111
      %p113 = scmp.ne.s32.totalorder %s102, %s105
      %p114 = scmp.eq.s32.totalorder %s29, 1
      %p115 = por %p113, %p114
      %p116 = scmp.ne.s32.totalorder %s105, %s106
      %p117 = scmp.eq.s32.totalorder %s29, 0
      %p118 = por %p116, %p117
      %p119 = scmp.ne.s32.totalorder %s105, %s106
      %p120 = scmp.eq.s32.totalorder %s30, 1
      %p121 = por %p119, %p120
      %p123 = scmp.ne.s32.totalorder %s106, %s122
      %p124 = scmp.eq.s32.totalorder %s30, 0
      %p125 = por %p123, %p124
      %s126 = ssub.s32 %s32, %s39
      %p127 = scmp.eq.s32.totalorder %s126, 0
      %s129 = sadd.s32 %s128, 1
      %s130 = scalar_select %p127, %s128, %s129
      %p133 = pneg %p127
      %p134 = scmp.eq.s32.totalorder %s24, 1
      %p135 = por %p133, %p134
      %p136 = scmp.ne.s32.totalorder %s128, %s131
      %p137 = scmp.eq.s32.totalorder %s24, 0
      %p138 = por %p136, %p137
      %p139 = scmp.ne.s32.totalorder %s128, %s131
      %p140 = scmp.eq.s32.totalorder %s29, 1
      %p141 = por %p139, %p140
      %p142 = scmp.ne.s32.totalorder %s131, %s132
      %p143 = scmp.eq.s32.totalorder %s29, 0
      %p144 = por %p142, %p143
      %p145 = scmp.ne.s32.totalorder %s131, %s132
      %p146 = scmp.eq.s32.totalorder %s30, 1
      %p147 = por %p145, %p146
      %p149 = scmp.ne.s32.totalorder %s132, %s148
      %p150 = scmp.eq.s32.totalorder %s30, 0
      %p151 = por %p149, %p150
      %s153 = sadd.s32 %s152, 1
      %p156 = scmp.eq.s32.totalorder %s24, 1
      %p157 = scmp.ne.s32.totalorder %s152, %s154
      %p158 = scmp.eq.s32.totalorder %s24, 0
      %p159 = por %p157, %p158
      %p160 = scmp.ne.s32.totalorder %s152, %s154
      %p161 = scmp.eq.s32.totalorder %s29, 1
      %p162 = por %p160, %p161
      %p163 = scmp.ne.s32.totalorder %s154, %s155
      %p164 = scmp.eq.s32.totalorder %s29, 0
      %p165 = por %p163, %p164
      %p166 = scmp.ne.s32.totalorder %s154, %s155
      %p167 = scmp.eq.s32.totalorder %s30, 1
      %p168 = por %p166, %p167
      %p170 = scmp.ne.s32.totalorder %s155, %s169
      %p171 = scmp.eq.s32.totalorder %s30, 0
      %p172 = por %p170, %p171
      %s174 = sadd.s32 %s173, 1
      %p177 = scmp.eq.s32.totalorder %s24, 1
      %p178 = scmp.ne.s32.totalorder %s173, %s175
      %p179 = scmp.eq.s32.totalorder %s24, 0
      %p180 = por %p178, %p179
      %p181 = scmp.ne.s32.totalorder %s173, %s175
      %p182 = scmp.eq.s32.totalorder %s29, 1
      %p183 = por %p181, %p182
      %p184 = scmp.ne.s32.totalorder %s175, %s176
      %p185 = scmp.eq.s32.totalorder %s29, 0
      %p186 = por %p184, %p185
      %p187 = scmp.ne.s32.totalorder %s175, %s176
      %p188 = scmp.eq.s32.totalorder %s30, 1
      %p189 = por %p187, %p188
      %p191 = scmp.ne.s32.totalorder %s176, %s190
      %p192 = scmp.eq.s32.totalorder %s30, 0
      %p193 = por %p191, %p192
      %s195 = sadd.s32 %s194, 1
      %p198 = scmp.eq.s32.totalorder %s24, 1
      %p199 = scmp.ne.s32.totalorder %s194, %s196
      %p200 = scmp.eq.s32.totalorder %s24, 0
      %p201 = por %p199, %p200
      %p202 = scmp.ne.s32.totalorder %s194, %s196
      %p203 = scmp.eq.s32.totalorder %s29, 1
      %p204 = por %p202, %p203
      %p205 = scmp.ne.s32.totalorder %s196, %s197
      %p206 = scmp.eq.s32.totalorder %s29, 0
      %p207 = por %p205, %p206
      %p208 = scmp.ne.s32.totalorder %s196, %s197
      %p209 = scmp.eq.s32.totalorder %s30, 1
      %p210 = por %p208, %p209
      %p212 = scmp.ne.s32.totalorder %s197, %s211
      %p213 = scmp.eq.s32.totalorder %s30, 0
      %p214 = por %p212, %p213
      %s215 = ssub.s32 %s31, %s43
      %p216 = scmp.eq.s32.totalorder %s215, 0
      %s218 = sadd.s32 %s217, 1
      %s219 = scalar_select %p216, %s217, %s218
      %p222 = pneg %p216
      %p223 = scmp.eq.s32.totalorder %s24, 1
      %p224 = por %p222, %p223
      %p225 = scmp.ne.s32.totalorder %s217, %s220
      %p226 = scmp.eq.s32.totalorder %s24, 0
      %p227 = por %p225, %p226
      %p228 = scmp.ne.s32.totalorder %s217, %s220
      %p229 = scmp.eq.s32.totalorder %s29, 1
      %p230 = por %p228, %p229
      %p231 = scmp.ne.s32.totalorder %s220, %s221
      %p232 = scmp.eq.s32.totalorder %s29, 0
      %p233 = por %p231, %p232
      %p234 = scmp.ne.s32.totalorder %s220, %s221
      %p235 = scmp.eq.s32.totalorder %s30, 1
      %p236 = por %p234, %p235
      %p238 = scmp.ne.s32.totalorder %s221, %s237
      %p239 = scmp.eq.s32.totalorder %s30, 0
      %p240 = por %p238, %p239
      %s241 = ssub.s32 %s31, %s43
      %p242 = scmp.eq.s32.totalorder %s241, 0
      %s244 = sadd.s32 %s243, 1
      %s245 = scalar_select %p242, %s243, %s244
      %p248 = pneg %p242
      %p249 = scmp.eq.s32.totalorder %s24, 1
      %p250 = por %p248, %p249
      %p251 = scmp.ne.s32.totalorder %s243, %s246
      %p252 = scmp.eq.s32.totalorder %s24, 0
      %p253 = por %p251, %p252
      %p254 = scmp.ne.s32.totalorder %s243, %s246
      %p255 = scmp.eq.s32.totalorder %s29, 1
      %p256 = por %p254, %p255
      %p257 = scmp.ne.s32.totalorder %s246, %s247
      %p258 = scmp.eq.s32.totalorder %s29, 0
      %p259 = por %p257, %p258
      %p260 = scmp.ne.s32.totalorder %s246, %s247
      %p261 = scmp.eq.s32.totalorder %s30, 1
      %p262 = por %p260, %p261
      %p264 = scmp.ne.s32.totalorder %s247, %s263
      %p265 = scmp.eq.s32.totalorder %s30, 0
      %p266 = por %p264, %p265
      %s267 = ssub.s32 %s31, %s43
      %p268 = scmp.eq.s32.totalorder %s267, 0
      %s270 = sadd.s32 %s269, 1
      %s271 = scalar_select %p268, %s269, %s270
      %p274 = pneg %p268
      %p275 = scmp.eq.s32.totalorder %s24, 1
      %p276 = por %p274, %p275
      %p277 = scmp.ne.s32.totalorder %s269, %s272
      %p278 = scmp.eq.s32.totalorder %s24, 0
      %p279 = por %p277, %p278
      %p280 = scmp.ne.s32.totalorder %s269, %s272
      %p281 = scmp.eq.s32.totalorder %s29, 1
      %p282 = por %p280, %p281
      %p283 = scmp.ne.s32.totalorder %s272, %s273
      %p284 = scmp.eq.s32.totalorder %s29, 0
      %p285 = por %p283, %p284
      %p286 = scmp.ne.s32.totalorder %s272, %s273
      %p287 = scmp.eq.s32.totalorder %s30, 1
      %p288 = por %p286, %p287
      %p290 = scmp.ne.s32.totalorder %s273, %s289
      %p291 = scmp.eq.s32.totalorder %s30, 0
      %p292 = por %p290, %p291
      %p293 = scmp.le.s32.totalorder 1, %s24
      %p294 = scmp.lt.s32.totalorder %s24, 3
      %p295 = pnand %p293, %p294
      %p296 = pneg %p295
      // Predicated region
      $region9: #{tpu_custom_call.1} parent=5 // pred_check
        _
      $region10: #{tpu_custom_call.1} parent=5 // pred_check_branch
        %298 = sbr.rel (%p295) target = $region12
      $region11: #{tpu_custom_call.1} parent=5 // pred_region
        %s299 = ssub.s32 %s24, 1
        // Predicated region
        $region13: #{tpu_custom_call.1} parent=11 // pred_check
          %p300 = pneg %p165
        $region14: #{tpu_custom_call.1} parent=11 // pred_check_branch
          %302 = sbr.rel (%p300) target = $region16
        $region15: #{tpu_custom_call.1} parent=11 // pred_region
          _
        $region16: #{tpu_custom_call.1} parent=11 // pred_fallthru
          _
        // Predicated region
        $region17: #{tpu_custom_call.1} parent=11 // pred_check
          %p303 = pneg %p186
        $region18: #{tpu_custom_call.1} parent=11 // pred_check_branch
          %305 = sbr.rel (%p303) target = $region20
        $region19: #{tpu_custom_call.1} parent=11 // pred_region
          _
        $region20: #{tpu_custom_call.1} parent=11 // pred_fallthru
          _
        // Predicated region
        $region21: #{tpu_custom_call.1} parent=11 // pred_check
          %p306 = pneg %p207
        $region22: #{tpu_custom_call.1} parent=11 // pred_check_branch
          %308 = sbr.rel (%p306) target = $region24
        $region23: #{tpu_custom_call.1} parent=11 // pred_region
          _
        $region24: #{tpu_custom_call.1} parent=11 // pred_fallthru
          _
      $region12: #{tpu_custom_call.1} parent=5 // pred_fallthru
        _
      %p309 = scmp.lt.s32.totalorder %s24, 2
      // Predicated region
      $region25: #{tpu_custom_call.1} parent=5 // pred_check
        %p310 = pneg %p309
      $region26: #{tpu_custom_call.1} parent=5 // pred_check_branch
        %312 = sbr.rel (%p310) target = $region28
      $region27: #{tpu_custom_call.1} parent=5 // pred_region
        // Predicated region
        $region29: #{tpu_custom_call.1} parent=27 // pred_check
          %p313 = pneg %p58
        $region30: #{tpu_custom_call.1} parent=27 // pred_check_branch
          %315 = sbr.rel (%p313) target = $region32
        $region31: #{tpu_custom_call.1} parent=27 // pred_region
          %s316 = smul.u32 4, %s32
          %p317 = scmp.lt.s32.totalorder %s31, 0
          %s318 = scalar_select %p317, %s31, 0
          %p319 = scmp.lt.s32.totalorder %s316, 7
          %s320 = scalar_select %p319, %s316, 7
          %s321 = smul.addr %s318, 8
          %s322 = sadd.s32 %s320, %s321
          %s323 = smul.addr %s322, 8
          %s324 = scalar_lea.vmem %s0, %s323
          %s325 = smul.u32 4, %s32
        $region32: #{tpu_custom_call.1} parent=27 // pred_fallthru
          _
        // Predicated region
        $region33: #{tpu_custom_call.1} parent=27 // pred_check
          %p326 = pneg %p86
        $region34: #{tpu_custom_call.1} parent=27 // pred_check_branch
          %328 = sbr.rel (%p326) target = $region36
        $region35: #{tpu_custom_call.1} parent=27 // pred_region
          %s329 = smul.u32 4, %s32
          %p330 = scmp.lt.s32.totalorder %s31, 0
          %s331 = scalar_select %p330, %s31, 0
          %p332 = scmp.lt.s32.totalorder %s329, 7
          %s333 = scalar_select %p332, %s329, 7
          %s334 = smul.addr %s331, 8
          %s335 = sadd.s32 %s333, %s334
          %s336 = smul.addr %s335, 8
          %s337 = scalar_lea.vmem %s1, %s336
          %s338 = smul.u32 4, %s32
        $region36: #{tpu_custom_call.1} parent=27 // pred_fallthru
          _
        // Predicated region
        $region37: #{tpu_custom_call.1} parent=27 // pred_check
          %p339 = pneg %p112
        $region38: #{tpu_custom_call.1} parent=27 // pred_check_branch
          %341 = sbr.rel (%p339) target = $region40
        $region39: #{tpu_custom_call.1} parent=27 // pred_region
          %s342 = sand.u32 %s102, 1
          %s343 = scalar_lea.sflag [#allocation3], %s342
          %s344 = sand.u32 %s102, 1
          %s345 = smul.addr %s344, 512
          %s346 = scalar_lea.vmem [#allocation2], %s345
          %s347 = smul.u32 64, %s32
          %s349 = ssub.s32 8192, 8192
          %350 = vsyncadd %s343, %s349
          %s351 = smul.addr %s347, 128
          %s352 = scalar_lea.hbm %s2, %s351
          %s353 = sshll.u32 %s346, 4
          %s354 = int_to_ptr.vmem [resolvable:$true] %s353
          %359 = dma.hbm_to_vmem [thread:$0]  %s352, 8192, %s354, %s343, 128, 128, 8
        $region40: #{tpu_custom_call.1} parent=27 // pred_fallthru
          _
        // Predicated region
        $region41: #{tpu_custom_call.1} parent=27 // pred_check
          %p360 = pneg %p138
        $region42: #{tpu_custom_call.1} parent=27 // pred_check_branch
          %362 = sbr.rel (%p360) target = $region44
        $region43: #{tpu_custom_call.1} parent=27 // pred_region
          %s363 = sand.u32 %s128, 1
          %s364 = scalar_lea.sflag [#allocation6], %s363
          %s365 = sand.u32 %s128, 1
          %s366 = smul.addr %s365, 512
          %s367 = scalar_lea.vmem [#allocation5], %s366
          %s368 = smul.u32 64, %s32
          %s370 = ssub.s32 8192, 8192
          %371 = vsyncadd %s364, %s370
          %s372 = smul.addr %s368, 128
          %s373 = scalar_lea.hbm %s3, %s372
          %s374 = sshll.u32 %s367, 4
          %s375 = int_to_ptr.vmem [resolvable:$true] %s374
          %380 = dma.hbm_to_vmem [thread:$0]  %s373, 8192, %s375, %s364, 128, 128, 8
        $region44: #{tpu_custom_call.1} parent=27 // pred_fallthru
          _
      $region28: #{tpu_custom_call.1} parent=5 // pred_fallthru
        _
      %p381 = scmp.le.s32.totalorder 1, %s24
      %p382 = scmp.lt.s32.totalorder %s24, 3
      %p383 = pnand %p381, %p382
      %p384 = pneg %p383
      // Predicated region
      $region45: #{tpu_custom_call.1} parent=5 // pred_check
        _
      $region46: #{tpu_custom_call.1} parent=5 // pred_check_branch
        %386 = sbr.rel (%p383) target = $region48
      $region47: #{tpu_custom_call.1} parent=5 // pred_region
        %s387 = ssub.s32 %s24, 1
        %s388 = sand.u32 %s105, 1
        %s389 = scalar_lea.sflag [#allocation3], %s388
        %s390 = sand.u32 %s105, 1
        %s391 = smul.addr %s390, 512
        %s392 = scalar_lea.vmem [#allocation2], %s391
        // Predicated region
        $region49: #{tpu_custom_call.1} parent=47 // pred_check
          %p393 = pneg %p118
        $region50: #{tpu_custom_call.1} parent=47 // pred_check_branch
          %395 = sbr.rel (%p393) target = $region52
        $region51: #{tpu_custom_call.1} parent=47 // pred_region
          %396 = dma.done %s389, 8192
        $region52: #{tpu_custom_call.1} parent=47 // pred_fallthru
          _
        %s397 = sand.u32 %s131, 1
        %s398 = scalar_lea.sflag [#allocation6], %s397
        %s399 = sand.u32 %s131, 1
        %s400 = smul.addr %s399, 512
        %s401 = scalar_lea.vmem [#allocation5], %s400
        // Predicated region
        $region53: #{tpu_custom_call.1} parent=47 // pred_check
          %p402 = pneg %p144
        $region54: #{tpu_custom_call.1} parent=47 // pred_check_branch
          %404 = sbr.rel (%p402) target = $region56
        $region55: #{tpu_custom_call.1} parent=47 // pred_region
          %405 = dma.done %s398, 8192
        $region56: #{tpu_custom_call.1} parent=47 // pred_fallthru
          _
        %s406 = smul.u32 4, %s34
        %p407 = scmp.lt.s32.totalorder %s33, 0
        %s408 = scalar_select %p407, %s33, 0
        %p409 = scmp.lt.s32.totalorder %s406, 7
        %s410 = scalar_select %p409, %s406, 7
        %s411 = smul.addr %s408, 8
        %s412 = sadd.s32 %s410, %s411
        %s413 = smul.addr %s412, 8
        %s414 = scalar_lea.vmem %s0, %s413
        %p415 = pneg %p64
        %p416 = pneg %p61
        %s417 = smul.u32 4, %s34
        %p418 = scmp.lt.s32.totalorder %s33, 0
        %s419 = scalar_select %p418, %s33, 0
        %p420 = scmp.lt.s32.totalorder %s417, 7
        %s421 = scalar_select %p420, %s417, 7
        %s422 = smul.addr %s419, 8
        %s423 = sadd.s32 %s421, %s422
        %s424 = smul.addr %s423, 8
        %s425 = scalar_lea.vmem %s1, %s424
        %p426 = pneg %p92
        %p427 = pneg %p89
        %s428 = sand.u32 %s105, 1
        %s429 = scalar_lea.sflag [#allocation3], %s428
        %s430 = sand.u32 %s105, 1
        %s431 = smul.addr %s430, 512
        %s432 = scalar_lea.vmem [#allocation2], %s431
        %p433 = pneg %p118
        %p434 = pneg %p115
        %s435 = sand.u32 %s131, 1
        %s436 = scalar_lea.sflag [#allocation6], %s435
        %s437 = sand.u32 %s131, 1
        %s438 = smul.addr %s437, 512
        %s439 = scalar_lea.vmem [#allocation5], %s438
        %p440 = pneg %p144
        %p441 = pneg %p141
        %p442 = pneg %p165
        %p443 = pneg %p162
        %p444 = pneg %p186
        %p445 = pneg %p183
        %p446 = pneg %p207
        %p447 = pneg %p204
        %p448 = pneg %p233
        %p449 = pneg %p230
        %p450 = pneg %p259
        %p451 = pneg %p256
        %p452 = pneg %p285
        %p453 = pneg %p282
        %s454 = smul.u32 4, %s34
        %p455 = scmp.lt.s32.totalorder %s33, 0
        %s456 = scalar_select %p455, %s33, 0
        %p457 = scmp.lt.s32.totalorder %s454, 7
        %s458 = scalar_select %p457, %s454, 7
        %s459 = smul.addr %s456, 8
        %s460 = sadd.s32 %s458, %s459
        %s461 = smul.addr %s460, 8
        %s462 = scalar_lea.vmem %s0, %s461
        %s463 = smul.u32 4, %s34
        %s464 = smul.u32 4, %s34
        %p465 = scmp.lt.s32.totalorder %s33, 0
        %s466 = scalar_select %p465, %s33, 0
        %p467 = scmp.lt.s32.totalorder %s464, 7
        %s468 = scalar_select %p467, %s464, 7
        %s469 = smul.addr %s466, 8
        %s470 = sadd.s32 %s468, %s469
        %s471 = smul.addr %s470, 8
        %s472 = scalar_lea.vmem %s1, %s471
        %s473 = smul.u32 4, %s34
        %s474 = smul.u32 64, %s34
        %s475 = smul.u32 64, %s34
        %p476 = scmp.eq.s32.totalorder %s34, 0
        // Predicated region
        $region57: #{tpu_custom_call.1} parent=47 // pred_check
          %p477 = pneg %p476
        $region58: #{tpu_custom_call.1} parent=47 // pred_check_branch
          %479 = sbr.rel (%p477) target = $region60
        $region59: #{tpu_custom_call.1} parent=47 // pred_region
          %480 = vst [vmem:[#allocation7] sm:$0xff] 0.0
          %481 = vst [vmem:[#allocation8] sm:$0xff] 0.0
        $region60: #{tpu_custom_call.1} parent=47 // pred_fallthru
          _
        %v482 = vld [vmem:[#allocation7] sm:$0xff]
        %v483 = vld [vmem:[%s462] sm:$0xff]
        %v484 = vld [vmem:[%s462 + $0x8] sm:$0xff]
        %v485 = vld [vmem:[%s462 + $0x10] sm:$0xff]
        %v486 = vld [vmem:[%s462 + $0x18] sm:$0xff]
        %v487 = vld [vmem:[%s392] sm:$0xff]
        %v488 = vld [vmem:[%s392 + $0x8] sm:$0xff]
        %v489 = vld [vmem:[%s392 + $0x10] sm:$0xff]
        %v490 = vld [vmem:[%s392 + $0x18] sm:$0xff]
        %v491 = vld [vmem:[%s392 + $0x20] sm:$0xff]
        %v492 = vld [vmem:[%s392 + $0x28] sm:$0xff]
        %v493 = vld [vmem:[%s392 + $0x30] sm:$0xff]
        %v494 = vld [vmem:[%s392 + $0x38] sm:$0xff]
        %v495 = vld [vmem:[%s392 + $0x40] sm:$0xff]
        %v496 = vld [vmem:[%s392 + $0x48] sm:$0xff]
        %v497 = vld [vmem:[%s392 + $0x50] sm:$0xff]
        %v498 = vld [vmem:[%s392 + $0x58] sm:$0xff]
        %v499 = vld [vmem:[%s392 + $0x60] sm:$0xff]
        %v500 = vld [vmem:[%s392 + $0x68] sm:$0xff]
        %v501 = vld [vmem:[%s392 + $0x70] sm:$0xff]
        %v502 = vld [vmem:[%s392 + $0x78] sm:$0xff]
        %v503 = vld [vmem:[%s392 + $0x80] sm:$0xff]
        %v504 = vld [vmem:[%s392 + $0x88] sm:$0xff]
        %v505 = vld [vmem:[%s392 + $0x90] sm:$0xff]
        %v506 = vld [vmem:[%s392 + $0x98] sm:$0xff]
        %v507 = vld [vmem:[%s392 + $0xa0] sm:$0xff]
        %v508 = vld [vmem:[%s392 + $0xa8] sm:$0xff]
        %v509 = vld [vmem:[%s392 + $0xb0] sm:$0xff]
        %v510 = vld [vmem:[%s392 + $0xb8] sm:$0xff]
        %v511 = vld [vmem:[%s392 + $0xc0] sm:$0xff]
        %v512 = vld [vmem:[%s392 + $0xc8] sm:$0xff]
        %v513 = vld [vmem:[%s392 + $0xd0] sm:$0xff]
        %v514 = vld [vmem:[%s392 + $0xd8] sm:$0xff]
        %v515 = vld [vmem:[%s392 + $0xe0] sm:$0xff]
        %v516 = vld [vmem:[%s392 + $0xe8] sm:$0xff]
        %v517 = vld [vmem:[%s392 + $0xf0] sm:$0xff]
        %v518 = vld [vmem:[%s392 + $0xf8] sm:$0xff]
        %v519 = vld [vmem:[%s392 + $0x100] sm:$0xff]
        %v520 = vld [vmem:[%s392 + $0x108] sm:$0xff]
        %v521 = vld [vmem:[%s392 + $0x110] sm:$0xff]
        %v522 = vld [vmem:[%s392 + $0x118] sm:$0xff]
        %v523 = vld [vmem:[%s392 + $0x120] sm:$0xff]
        %v524 = vld [vmem:[%s392 + $0x128] sm:$0xff]
        %v525 = vld [vmem:[%s392 + $0x130] sm:$0xff]
        %v526 = vld [vmem:[%s392 + $0x138] sm:$0xff]
        %v527 = vld [vmem:[%s392 + $0x140] sm:$0xff]
        %v528 = vld [vmem:[%s392 + $0x148] sm:$0xff]
        %v529 = vld [vmem:[%s392 + $0x150] sm:$0xff]
        %v530 = vld [vmem:[%s392 + $0x158] sm:$0xff]
        %v531 = vld [vmem:[%s392 + $0x160] sm:$0xff]
        %v532 = vld [vmem:[%s392 + $0x168] sm:$0xff]
        %v533 = vld [vmem:[%s392 + $0x170] sm:$0xff]
        %v534 = vld [vmem:[%s392 + $0x178] sm:$0xff]
        %v535 = vld [vmem:[%s392 + $0x180] sm:$0xff]
        %v536 = vld [vmem:[%s392 + $0x188] sm:$0xff]
        %v537 = vld [vmem:[%s392 + $0x190] sm:$0xff]
        %v538 = vld [vmem:[%s392 + $0x198] sm:$0xff]
        %v539 = vld [vmem:[%s392 + $0x1a0] sm:$0xff]
        %v540 = vld [vmem:[%s392 + $0x1a8] sm:$0xff]
        %v541 = vld [vmem:[%s392 + $0x1b0] sm:$0xff]
        %v542 = vld [vmem:[%s392 + $0x1b8] sm:$0xff]
        %v543 = vld [vmem:[%s392 + $0x1c0] sm:$0xff]
        %v544 = vld [vmem:[%s392 + $0x1c8] sm:$0xff]
        %v545 = vld [vmem:[%s392 + $0x1d0] sm:$0xff]
        %v546 = vld [vmem:[%s392 + $0x1d8] sm:$0xff]
        %v547 = vld [vmem:[%s392 + $0x1e0] sm:$0xff]
        %v548 = vld [vmem:[%s392 + $0x1e8] sm:$0xff]
        %v549 = vld [vmem:[%s392 + $0x1f0] sm:$0xff]
        %v550 = vld [vmem:[%s392 + $0x1f8] sm:$0xff]
        %551 = vmatprep.subr.mxu0 0.0
        %552 = vmatpush1.msra.mxu0 %v502
        %553 = vmatprep.subr.mxu0 0.0
        %554 = vmatpush1.msra.mxu0 %v501
        %555 = vmatprep.subr.mxu0 0.0
        %556 = vmatpush1.msra.mxu0 %v500
        %557 = vmatprep.subr.mxu0 0.0
        %558 = vmatpush1.msra.mxu0 %v499
        %559 = vmatprep.subr.mxu0 0.0
        %560 = vmatpush1.msra.mxu0 %v498
        %561 = vmatprep.subr.mxu0 0.0
        %562 = vmatpush1.msra.mxu0 %v497
        %563 = vmatprep.subr.mxu0 0.0
        %564 = vmatpush1.msra.mxu0 %v496
        %565 = vmatprep.subr.mxu0 0.0
        %566 = vmatpush1.msra.mxu0 %v495
        %567 = vmatprep.subr.mxu0 0.0
        %568 = vmatpush1.msra.mxu0 %v494
        %569 = vmatprep.subr.mxu0 0.0
        %570 = vmatpush1.msra.mxu0 %v493
        %571 = vmatprep.subr.mxu0 0.0
        %572 = vmatpush1.msra.mxu0 %v492
        %573 = vmatprep.subr.mxu0 0.0
        %574 = vmatpush1.msra.mxu0 %v491
        %575 = vmatprep.subr.mxu0 0.0
        %576 = vmatpush1.msra.mxu0 %v490
        %577 = vmatprep.subr.mxu0 0.0
        %578 = vmatpush1.msra.mxu0 %v489
        %579 = vmatprep.subr.mxu0 0.0
        %580 = vmatpush1.msra.mxu0 %v488
        %581 = vmatprep.subr.mxu0 0.0
        %582 = vmatpush1.msra.mxu0 %v487
        %583 = vmatprep.subr.mxu0 0.0
        %584 = vmatpush2.msra.mxu0 %v518
        %585 = vmatprep.subr.mxu0 0.0
        %586 = vmatpush2.msra.mxu0 %v517
        %587 = vmatprep.subr.mxu0 0.0
        %588 = vmatpush2.msra.mxu0 %v516
        %589 = vmatprep.subr.mxu0 0.0
        %590 = vmatpush2.msra.mxu0 %v515
        %591 = vmatprep.subr.mxu0 0.0
        %592 = vmatpush2.msra.mxu0 %v514
        %593 = vmatprep.subr.mxu0 0.0
        %594 = vmatpush2.msra.mxu0 %v513
        %595 = vmatprep.subr.mxu0 0.0
        %596 = vmatpush2.msra.mxu0 %v512
        %597 = vmatprep.subr.mxu0 0.0
        %598 = vmatpush2.msra.mxu0 %v511
        %599 = vmatprep.subr.mxu0 0.0
        %600 = vmatpush2.msra.mxu0 %v510
        %601 = vmatprep.subr.mxu0 0.0
        %602 = vmatpush2.msra.mxu0 %v509
        %603 = vmatprep.subr.mxu0 0.0
        %604 = vmatpush2.msra.mxu0 %v508
        %605 = vmatprep.subr.mxu0 0.0
        %606 = vmatpush2.msra.mxu0 %v507
        %607 = vmatprep.subr.mxu0 0.0
        %608 = vmatpush2.msra.mxu0 %v506
        %609 = vmatprep.subr.mxu0 0.0
        %610 = vmatpush2.msra.mxu0 %v505
        %611 = vmatprep.subr.mxu0 0.0
        %612 = vmatpush2.msra.mxu0 %v504
        %613 = vmatprep.subr.mxu0 0.0
        %614 = vmatpush2.msra.mxu0 %v503
        %615 = vmatprep.mubr.f32.mxu0 %v484
        %616 = vmatmul.mubr.f32.gmra.mxu0 %v483
        %v617 = vpop.f32.mrf.mxu0
        %v618 = vadd.f32 0.0, %v617
        %v619 = vpop.f32.mrf.mxu0
        %620 = vdwg.mxu0
        %621 = vmatprep.subr.mxu0 0.0
        %622 = vmatpush1.msra.mxu0 %v534
        %623 = vmatprep.subr.mxu0 0.0
        %624 = vmatpush1.msra.mxu0 %v533
        %625 = vmatprep.subr.mxu0 0.0
        %626 = vmatpush1.msra.mxu0 %v532
        %627 = vmatprep.subr.mxu0 0.0
        %628 = vmatpush1.msra.mxu0 %v531
        %629 = vmatprep.subr.mxu0 0.0
        %630 = vmatpush1.msra.mxu0 %v530
        %631 = vmatprep.subr.mxu0 0.0
        %632 = vmatpush1.msra.mxu0 %v529
        %633 = vmatprep.subr.mxu0 0.0
        %634 = vmatpush1.msra.mxu0 %v528
        %635 = vmatprep.subr.mxu0 0.0
        %636 = vmatpush1.msra.mxu0 %v527
        %637 = vmatprep.subr.mxu0 0.0
        %638 = vmatpush1.msra.mxu0 %v526
        %639 = vmatprep.subr.mxu0 0.0
        %640 = vmatpush1.msra.mxu0 %v525
        %641 = vmatprep.subr.mxu0 0.0
        %642 = vmatpush1.msra.mxu0 %v524
        %643 = vmatprep.subr.mxu0 0.0
        %644 = vmatpush1.msra.mxu0 %v523
        %645 = vmatprep.subr.mxu0 0.0
        %646 = vmatpush1.msra.mxu0 %v522
        %647 = vmatprep.subr.mxu0 0.0
        %648 = vmatpush1.msra.mxu0 %v521
        %649 = vmatprep.subr.mxu0 0.0
        %650 = vmatpush1.msra.mxu0 %v520
        %651 = vmatprep.subr.mxu0 0.0
        %652 = vmatpush1.msra.mxu0 %v519
        %653 = vmatprep.subr.mxu0 0.0
        %654 = vmatpush2.msra.mxu0 %v550
        %655 = vmatprep.subr.mxu0 0.0
        %656 = vmatpush2.msra.mxu0 %v549
        %657 = vmatprep.subr.mxu0 0.0
        %658 = vmatpush2.msra.mxu0 %v548
        %659 = vmatprep.subr.mxu0 0.0
        %660 = vmatpush2.msra.mxu0 %v547
        %661 = vmatprep.subr.mxu0 0.0
        %662 = vmatpush2.msra.mxu0 %v546
        %663 = vmatprep.subr.mxu0 0.0
        %664 = vmatpush2.msra.mxu0 %v545
        %665 = vmatprep.subr.mxu0 0.0
        %666 = vmatpush2.msra.mxu0 %v544
        %667 = vmatprep.subr.mxu0 0.0
        %668 = vmatpush2.msra.mxu0 %v543
        %669 = vmatprep.subr.mxu0 0.0
        %670 = vmatpush2.msra.mxu0 %v542
        %671 = vmatprep.subr.mxu0 0.0
        %672 = vmatpush2.msra.mxu0 %v541
        %673 = vmatprep.subr.mxu0 0.0
        %674 = vmatpush2.msra.mxu0 %v540
        %675 = vmatprep.subr.mxu0 0.0
        %676 = vmatpush2.msra.mxu0 %v539
        %677 = vmatprep.subr.mxu0 0.0
        %678 = vmatpush2.msra.mxu0 %v538
        %679 = vmatprep.subr.mxu0 0.0
        %680 = vmatpush2.msra.mxu0 %v537
        %681 = vmatprep.subr.mxu0 0.0
        %682 = vmatpush2.msra.mxu0 %v536
        %683 = vmatprep.subr.mxu0 0.0
        %684 = vmatpush2.msra.mxu0 %v535
        %685 = vmatprep.mubr.f32.mxu0 %v486
        %686 = vmatmul.mubr.f32.gmra.mxu0 %v485
        %v687 = vpop.f32.mrf.mxu0
        %v688 = vadd.f32 %v618, %v687
        %v689 = vpop.f32.mrf.mxu0
        %690 = vdwg.mxu0
        %v691 = vadd.f32 %v482, %v688
        %692 = vst [vmem:[#allocation7] sm:$0xff] %v691
        %v693 = vld [vmem:[#allocation8] sm:$0xff]
        %v694 = vld [vmem:[%s472] sm:$0xff]
        %v695 = vld [vmem:[%s472 + $0x8] sm:$0xff]
        %v696 = vld [vmem:[%s472 + $0x10] sm:$0xff]
        %v697 = vld [vmem:[%s472 + $0x18] sm:$0xff]
        %v698 = vld [vmem:[%s401] sm:$0xff]
        %v699 = vld [vmem:[%s401 + $0x8] sm:$0xff]
        %v700 = vld [vmem:[%s401 + $0x10] sm:$0xff]
        %v701 = vld [vmem:[%s401 + $0x18] sm:$0xff]
        %v702 = vld [vmem:[%s401 + $0x20] sm:$0xff]
        %v703 = vld [vmem:[%s401 + $0x28] sm:$0xff]
        %v704 = vld [vmem:[%s401 + $0x30] sm:$0xff]
        %v705 = vld [vmem:[%s401 + $0x38] sm:$0xff]
        %v706 = vld [vmem:[%s401 + $0x40] sm:$0xff]
        %v707 = vld [vmem:[%s401 + $0x48] sm:$0xff]
        %v708 = vld [vmem:[%s401 + $0x50] sm:$0xff]
        %v709 = vld [vmem:[%s401 + $0x58] sm:$0xff]
        %v710 = vld [vmem:[%s401 + $0x60] sm:$0xff]
        %v711 = vld [vmem:[%s401 + $0x68] sm:$0xff]
        %v712 = vld [vmem:[%s401 + $0x70] sm:$0xff]
        %v713 = vld [vmem:[%s401 + $0x78] sm:$0xff]
        %v714 = vld [vmem:[%s401 + $0x80] sm:$0xff]
        %v715 = vld [vmem:[%s401 + $0x88] sm:$0xff]
        %v716 = vld [vmem:[%s401 + $0x90] sm:$0xff]
        %v717 = vld [vmem:[%s401 + $0x98] sm:$0xff]
        %v718 = vld [vmem:[%s401 + $0xa0] sm:$0xff]
        %v719 = vld [vmem:[%s401 + $0xa8] sm:$0xff]
        %v720 = vld [vmem:[%s401 + $0xb0] sm:$0xff]
        %v721 = vld [vmem:[%s401 + $0xb8] sm:$0xff]
        %v722 = vld [vmem:[%s401 + $0xc0] sm:$0xff]
        %v723 = vld [vmem:[%s401 + $0xc8] sm:$0xff]
        %v724 = vld [vmem:[%s401 + $0xd0] sm:$0xff]
        %v725 = vld [vmem:[%s401 + $0xd8] sm:$0xff]
        %v726 = vld [vmem:[%s401 + $0xe0] sm:$0xff]
        %v727 = vld [vmem:[%s401 + $0xe8] sm:$0xff]
        %v728 = vld [vmem:[%s401 + $0xf0] sm:$0xff]
        %v729 = vld [vmem:[%s401 + $0xf8] sm:$0xff]
        %v730 = vld [vmem:[%s401 + $0x100] sm:$0xff]
        %v731 = vld [vmem:[%s401 + $0x108] sm:$0xff]
        %v732 = vld [vmem:[%s401 + $0x110] sm:$0xff]
        %v733 = vld [vmem:[%s401 + $0x118] sm:$0xff]
        %v734 = vld [vmem:[%s401 + $0x120] sm:$0xff]
        %v735 = vld [vmem:[%s401 + $0x128] sm:$0xff]
        %v736 = vld [vmem:[%s401 + $0x130] sm:$0xff]
        %v737 = vld [vmem:[%s401 + $0x138] sm:$0xff]
        %v738 = vld [vmem:[%s401 + $0x140] sm:$0xff]
        %v739 = vld [vmem:[%s401 + $0x148] sm:$0xff]
        %v740 = vld [vmem:[%s401 + $0x150] sm:$0xff]
        %v741 = vld [vmem:[%s401 + $0x158] sm:$0xff]
        %v742 = vld [vmem:[%s401 + $0x160] sm:$0xff]
        %v743 = vld [vmem:[%s401 + $0x168] sm:$0xff]
        %v744 = vld [vmem:[%s401 + $0x170] sm:$0xff]
        %v745 = vld [vmem:[%s401 + $0x178] sm:$0xff]
        %v746 = vld [vmem:[%s401 + $0x180] sm:$0xff]
        %v747 = vld [vmem:[%s401 + $0x188] sm:$0xff]
        %v748 = vld [vmem:[%s401 + $0x190] sm:$0xff]
        %v749 = vld [vmem:[%s401 + $0x198] sm:$0xff]
        %v750 = vld [vmem:[%s401 + $0x1a0] sm:$0xff]
        %v751 = vld [vmem:[%s401 + $0x1a8] sm:$0xff]
        %v752 = vld [vmem:[%s401 + $0x1b0] sm:$0xff]
        %v753 = vld [vmem:[%s401 + $0x1b8] sm:$0xff]
        %v754 = vld [vmem:[%s401 + $0x1c0] sm:$0xff]
        %v755 = vld [vmem:[%s401 + $0x1c8] sm:$0xff]
        %v756 = vld [vmem:[%s401 + $0x1d0] sm:$0xff]
        %v757 = vld [vmem:[%s401 + $0x1d8] sm:$0xff]
        %v758 = vld [vmem:[%s401 + $0x1e0] sm:$0xff]
        %v759 = vld [vmem:[%s401 + $0x1e8] sm:$0xff]
        %v760 = vld [vmem:[%s401 + $0x1f0] sm:$0xff]
        %v761 = vld [vmem:[%s401 + $0x1f8] sm:$0xff]
        %762 = vmatprep.subr.mxu0 0.0
        %763 = vmatpush1.msra.mxu0 %v713
        %764 = vmatprep.subr.mxu0 0.0
        %765 = vmatpush1.msra.mxu0 %v712
        %766 = vmatprep.subr.mxu0 0.0
        %767 = vmatpush1.msra.mxu0 %v711
        %768 = vmatprep.subr.mxu0 0.0
        %769 = vmatpush1.msra.mxu0 %v710
        %770 = vmatprep.subr.mxu0 0.0
        %771 = vmatpush1.msra.mxu0 %v709
        %772 = vmatprep.subr.mxu0 0.0
        %773 = vmatpush1.msra.mxu0 %v708
        %774 = vmatprep.subr.mxu0 0.0
        %775 = vmatpush1.msra.mxu0 %v707
        %776 = vmatprep.subr.mxu0 0.0
        %777 = vmatpush1.msra.mxu0 %v706
        %778 = vmatprep.subr.mxu0 0.0
        %779 = vmatpush1.msra.mxu0 %v705
        %780 = vmatprep.subr.mxu0 0.0
        %781 = vmatpush1.msra.mxu0 %v704
        %782 = vmatprep.subr.mxu0 0.0
        %783 = vmatpush1.msra.mxu0 %v703
        %784 = vmatprep.subr.mxu0 0.0
        %785 = vmatpush1.msra.mxu0 %v702
        %786 = vmatprep.subr.mxu0 0.0
        %787 = vmatpush1.msra.mxu0 %v701
        %788 = vmatprep.subr.mxu0 0.0
        %789 = vmatpush1.msra.mxu0 %v700
        %790 = vmatprep.subr.mxu0 0.0
        %791 = vmatpush1.msra.mxu0 %v699
        %792 = vmatprep.subr.mxu0 0.0
        %793 = vmatpush1.msra.mxu0 %v698
        %794 = vmatprep.subr.mxu0 0.0
        %795 = vmatpush2.msra.mxu0 %v729
        %796 = vmatprep.subr.mxu0 0.0
        %797 = vmatpush2.msra.mxu0 %v728
        %798 = vmatprep.subr.mxu0 0.0
        %799 = vmatpush2.msra.mxu0 %v727
        %800 = vmatprep.subr.mxu0 0.0
        %801 = vmatpush2.msra.mxu0 %v726
        %802 = vmatprep.subr.mxu0 0.0
        %803 = vmatpush2.msra.mxu0 %v725
        %804 = vmatprep.subr.mxu0 0.0
        %805 = vmatpush2.msra.mxu0 %v724
        %806 = vmatprep.subr.mxu0 0.0
        %807 = vmatpush2.msra.mxu0 %v723
        %808 = vmatprep.subr.mxu0 0.0
        %809 = vmatpush2.msra.mxu0 %v722
        %810 = vmatprep.subr.mxu0 0.0
        %811 = vmatpush2.msra.mxu0 %v721
        %812 = vmatprep.subr.mxu0 0.0
        %813 = vmatpush2.msra.mxu0 %v720
        %814 = vmatprep.subr.mxu0 0.0
        %815 = vmatpush2.msra.mxu0 %v719
        %816 = vmatprep.subr.mxu0 0.0
        %817 = vmatpush2.msra.mxu0 %v718
        %818 = vmatprep.subr.mxu0 0.0
        %819 = vmatpush2.msra.mxu0 %v717
        %820 = vmatprep.subr.mxu0 0.0
        %821 = vmatpush2.msra.mxu0 %v716
        %822 = vmatprep.subr.mxu0 0.0
        %823 = vmatpush2.msra.mxu0 %v715
        %824 = vmatprep.subr.mxu0 0.0
        %825 = vmatpush2.msra.mxu0 %v714
        %826 = vmatprep.mubr.f32.mxu0 %v695
        %827 = vmatmul.mubr.f32.gmra.mxu0 %v694
        %v828 = vpop.f32.mrf.mxu0
        %v829 = vadd.f32 0.0, %v828
        %v830 = vpop.f32.mrf.mxu0
        %831 = vdwg.mxu0
        %832 = vmatprep.subr.mxu0 0.0
        %833 = vmatpush1.msra.mxu0 %v745
        %834 = vmatprep.subr.mxu0 0.0
        %835 = vmatpush1.msra.mxu0 %v744
        %836 = vmatprep.subr.mxu0 0.0
        %837 = vmatpush1.msra.mxu0 %v743
        %838 = vmatprep.subr.mxu0 0.0
        %839 = vmatpush1.msra.mxu0 %v742
        %840 = vmatprep.subr.mxu0 0.0
        %841 = vmatpush1.msra.mxu0 %v741
        %842 = vmatprep.subr.mxu0 0.0
        %843 = vmatpush1.msra.mxu0 %v740
        %844 = vmatprep.subr.mxu0 0.0
        %845 = vmatpush1.msra.mxu0 %v739
        %846 = vmatprep.subr.mxu0 0.0
        %847 = vmatpush1.msra.mxu0 %v738
        %848 = vmatprep.subr.mxu0 0.0
        %849 = vmatpush1.msra.mxu0 %v737
        %850 = vmatprep.subr.mxu0 0.0
        %851 = vmatpush1.msra.mxu0 %v736
        %852 = vmatprep.subr.mxu0 0.0
        %853 = vmatpush1.msra.mxu0 %v735
        %854 = vmatprep.subr.mxu0 0.0
        %855 = vmatpush1.msra.mxu0 %v734
        %856 = vmatprep.subr.mxu0 0.0
        %857 = vmatpush1.msra.mxu0 %v733
        %858 = vmatprep.subr.mxu0 0.0
        %859 = vmatpush1.msra.mxu0 %v732
        %860 = vmatprep.subr.mxu0 0.0
        %861 = vmatpush1.msra.mxu0 %v731
        %862 = vmatprep.subr.mxu0 0.0
        %863 = vmatpush1.msra.mxu0 %v730
        %864 = vmatprep.subr.mxu0 0.0
        %865 = vmatpush2.msra.mxu0 %v761
        %866 = vmatprep.subr.mxu0 0.0
        %867 = vmatpush2.msra.mxu0 %v760
        %868 = vmatprep.subr.mxu0 0.0
        %869 = vmatpush2.msra.mxu0 %v759
        %870 = vmatprep.subr.mxu0 0.0
        %871 = vmatpush2.msra.mxu0 %v758
        %872 = vmatprep.subr.mxu0 0.0
        %873 = vmatpush2.msra.mxu0 %v757
        %874 = vmatprep.subr.mxu0 0.0
        %875 = vmatpush2.msra.mxu0 %v756
        %876 = vmatprep.subr.mxu0 0.0
        %877 = vmatpush2.msra.mxu0 %v755
        %878 = vmatprep.subr.mxu0 0.0
        %879 = vmatpush2.msra.mxu0 %v754
        %880 = vmatprep.subr.mxu0 0.0
        %881 = vmatpush2.msra.mxu0 %v753
        %882 = vmatprep.subr.mxu0 0.0
        %883 = vmatpush2.msra.mxu0 %v752
        %884 = vmatprep.subr.mxu0 0.0
        %885 = vmatpush2.msra.mxu0 %v751
        %886 = vmatprep.subr.mxu0 0.0
        %887 = vmatpush2.msra.mxu0 %v750
        %888 = vmatprep.subr.mxu0 0.0
        %889 = vmatpush2.msra.mxu0 %v749
        %890 = vmatprep.subr.mxu0 0.0
        %891 = vmatpush2.msra.mxu0 %v748
        %892 = vmatprep.subr.mxu0 0.0
        %893 = vmatpush2.msra.mxu0 %v747
        %894 = vmatprep.subr.mxu0 0.0
        %895 = vmatpush2.msra.mxu0 %v746
        %896 = vmatprep.mubr.f32.mxu0 %v697
        %897 = vmatmul.mubr.f32.gmra.mxu0 %v696
        %v898 = vpop.f32.mrf.mxu0
        %v899 = vadd.f32 %v829, %v898
        %v900 = vpop.f32.mrf.mxu0
        %901 = vdwg.mxu0
        %v902 = vadd.f32 %v693, %v899
        %903 = vst [vmem:[#allocation8] sm:$0xff] %v902
        %p904 = scmp.eq.s32.totalorder %s34, 1
        // Predicated region
        $region61: #{tpu_custom_call.1} parent=47 // pred_check
          %p905 = pneg %p904
        $region62: #{tpu_custom_call.1} parent=47 // pred_check_branch
          %907 = sbr.rel (%p905) target = $region64
        $region63: #{tpu_custom_call.1} parent=47 // pred_region
          %v908 = vld [vmem:[#allocation7] sm:$0xff]
          %v909 = vld [vmem:[%s4] sm:$0x1]
          %v911 = vlaneseq
          %v912 = vshrl.u32 %v911, 7
          %v913 = vsub.s32 0, %v912
          %v914 = vrot.slane %v909, %v913
          %v916 = vadd.f32 %v908, %v914
          %v917 = vld [vmem:[#allocation8] sm:$0xff]
          %v918 = vld [vmem:[%s5] sm:$0x1]
          %v920 = vlaneseq
          %v921 = vshrl.u32 %v920, 7
          %v922 = vsub.s32 0, %v921
          %v923 = vrot.slane %v918, %v922
          %v925 = vadd.f32 %v917, %v923
          %v926 = vmul.f32 %v916, %v916
          %927 = vadd.xlane.f32.xlu0 %v926
          %v928 = vpop.xlane.xlu0 %927
          %v929 = vmax.f32 %v928, 1e-24
          %v930 = vrsqrt.pop %v929
          %v931 = vmul.f32 %v925, %v925
          %932 = vadd.xlane.f32.xlu0 %v931
          %v933 = vpop.xlane.xlu0 %932
          %v934 = vmax.f32 %v933, 1e-24
          %v935 = vrsqrt.pop %v934
          %v936 = vmul.f32 %v930, 10.0
          %v937 = vmul.f32 %v916, %v936
          %938 = vst [vmem:[#allocation7] sm:$0xff] %v937
          %v939 = vmul.f32 %v925, %v935
          %940 = vst [vmem:[#allocation8] sm:$0xff] %v939
          %v941 = vld [vmem:[%s6] sm:$0xff]
          %v942 = vld [vmem:[%s6 + $0x8] sm:$0xff]
          %v943 = vld [vmem:[%s6 + $0x10] sm:$0xff]
          %v944 = vld [vmem:[%s6 + $0x18] sm:$0xff]
          %v945 = vld [vmem:[%s6 + $0x20] sm:$0xff]
          %v946 = vld [vmem:[%s6 + $0x28] sm:$0xff]
          %v947 = vld [vmem:[%s6 + $0x30] sm:$0xff]
          %v948 = vld [vmem:[%s6 + $0x38] sm:$0xff]
          %v949 = vld [vmem:[%s6 + $0x40] sm:$0xff]
          %v950 = vld [vmem:[%s6 + $0x48] sm:$0xff]
          %v951 = vld [vmem:[%s6 + $0x50] sm:$0xff]
          %v952 = vld [vmem:[%s6 + $0x58] sm:$0xff]
          %v953 = vld [vmem:[%s6 + $0x60] sm:$0xff]
          %v954 = vld [vmem:[%s6 + $0x68] sm:$0xff]
          %v955 = vld [vmem:[%s6 + $0x70] sm:$0xff]
          %v956 = vld [vmem:[%s6 + $0x78] sm:$0xff]
          %957 = vmatprep.subr.mxu0 0.0
          %958 = vmatpush1.msra.mxu0 %v956
          %959 = vmatprep.subr.mxu0 0.0
          %960 = vmatpush1.msra.mxu0 %v955
          %961 = vmatprep.subr.mxu0 0.0
          %962 = vmatpush1.msra.mxu0 %v954
          %963 = vmatprep.subr.mxu0 0.0
          %964 = vmatpush1.msra.mxu0 %v953
          %965 = vmatprep.subr.mxu0 0.0
          %966 = vmatpush1.msra.mxu0 %v952
          %967 = vmatprep.subr.mxu0 0.0
          %968 = vmatpush1.msra.mxu0 %v951
          %969 = vmatprep.subr.mxu0 0.0
          %970 = vmatpush1.msra.mxu0 %v950
          %971 = vmatprep.subr.mxu0 0.0
          %972 = vmatpush1.msra.mxu0 %v949
          %973 = vmatprep.subr.mxu0 0.0
          %974 = vmatpush1.msra.mxu0 %v948
          %975 = vmatprep.subr.mxu0 0.0
          %976 = vmatpush1.msra.mxu0 %v947
          %977 = vmatprep.subr.mxu0 0.0
          %978 = vmatpush1.msra.mxu0 %v946
          %979 = vmatprep.subr.mxu0 0.0
          %980 = vmatpush1.msra.mxu0 %v945
          %981 = vmatprep.subr.mxu0 0.0
          %982 = vmatpush1.msra.mxu0 %v944
          %983 = vmatprep.subr.mxu0 0.0
          %984 = vmatpush1.msra.mxu0 %v943
          %985 = vmatprep.subr.mxu0 0.0
          %986 = vmatpush1.msra.mxu0 %v942
          %987 = vmatprep.subr.mxu0 0.0
          %988 = vmatpush1.msra.mxu0 %v941
          %989 = vmatprep.subr.mxu0 0.0
          %990 = vmatpush2.msra.mxu0 0.0
          %991 = vmatprep.subr.mxu0 0.0
          %992 = vmatpush2.msra.mxu0 0.0
          %993 = vmatprep.subr.mxu0 0.0
          %994 = vmatpush2.msra.mxu0 0.0
          %995 = vmatprep.subr.mxu0 0.0
          %996 = vmatpush2.msra.mxu0 0.0
          %997 = vmatprep.subr.mxu0 0.0
          %998 = vmatpush2.msra.mxu0 0.0
          %999 = vmatprep.subr.mxu0 0.0
          %1000 = vmatpush2.msra.mxu0 0.0
          %1001 = vmatprep.subr.mxu0 0.0
          %1002 = vmatpush2.msra.mxu0 0.0
          %1003 = vmatprep.subr.mxu0 0.0
          %1004 = vmatpush2.msra.mxu0 0.0
          %1005 = vmatprep.subr.mxu0 0.0
          %1006 = vmatpush2.msra.mxu0 0.0
          %1007 = vmatprep.subr.mxu0 0.0
          %1008 = vmatpush2.msra.mxu0 0.0
          %1009 = vmatprep.subr.mxu0 0.0
          %1010 = vmatpush2.msra.mxu0 0.0
          %1011 = vmatprep.subr.mxu0 0.0
          %1012 = vmatpush2.msra.mxu0 0.0
          %1013 = vmatprep.subr.mxu0 0.0
          %1014 = vmatpush2.msra.mxu0 0.0
          %1015 = vmatprep.subr.mxu0 0.0
          %1016 = vmatpush2.msra.mxu0 0.0
          %1017 = vmatprep.subr.mxu0 0.0
          %1018 = vmatpush2.msra.mxu0 0.0
          %1019 = vmatprep.subr.mxu0 0.0
          %1020 = vmatpush2.msra.mxu0 0.0
          %1021 = vmatprep.mubr.f32.mxu0 0.0
          %1022 = vmatmul.mubr.f32.gmra.mxu0 %v937
          %v1023 = vpop.f32.mrf.mxu0
          %v1024 = vadd.f32 0.0, %v1023
          %v1025 = vpop.f32.mrf.mxu0
          %1026 = vdwg.mxu0
          %vm1027 = vcmask 523264
          %1028 = vst.msk [vmem:[#allocation10] sm:$0xff] %vm1027, %v1024
        $region64: #{tpu_custom_call.1} parent=47 // pred_fallthru
          _
        // Predicated region
        $region65: #{tpu_custom_call.1} parent=47 // pred_check
          %p1029 = pneg %p230
        $region66: #{tpu_custom_call.1} parent=47 // pred_check_branch
          %1031 = sbr.rel (%p1029) target = $region68
        $region67: #{tpu_custom_call.1} parent=47 // pred_region
          %s1033 = ssub.s32 128, 128
          %1034 = vsyncadd [#allocation4], %s1033
          %s1035 = smul.addr %s33, 128
          %s1036 = scalar_lea.hbm %s7, %s1035
          %s1038 = sshll.u32 [#allocation7], 4
          %s1039 = int_to_ptr.vmem [resolvable:$true] %s1038
          %1041 = dma.vmem_to_hbm [thread:$0]  %s1039, 128, %s1036, [#allocation4]
        $region68: #{tpu_custom_call.1} parent=47 // pred_fallthru
          _
        // Predicated region
        $region69: #{tpu_custom_call.1} parent=47 // pred_check
          %p1042 = pneg %p256
        $region70: #{tpu_custom_call.1} parent=47 // pred_check_branch
          %1044 = sbr.rel (%p1042) target = $region72
        $region71: #{tpu_custom_call.1} parent=47 // pred_region
          %s1046 = ssub.s32 128, 128
          %1047 = vsyncadd [#allocation9], %s1046
          %s1048 = smul.addr %s33, 128
          %s1049 = scalar_lea.hbm %s8, %s1048
          %s1051 = sshll.u32 [#allocation8], 4
          %s1052 = int_to_ptr.vmem [resolvable:$true] %s1051
          %1054 = dma.vmem_to_hbm [thread:$0]  %s1052, 128, %s1049, [#allocation9]
        $region72: #{tpu_custom_call.1} parent=47 // pred_fallthru
          _
        // Predicated region
        $region73: #{tpu_custom_call.1} parent=47 // pred_check
          %p1055 = pneg %p282
        $region74: #{tpu_custom_call.1} parent=47 // pred_check_branch
          %1057 = sbr.rel (%p1055) target = $region76
        $region75: #{tpu_custom_call.1} parent=47 // pred_region
          %s1059 = ssub.s32 128, 128
          %1060 = vsyncadd [#allocation9], %s1059
          %s1061 = smul.addr %s33, 128
          %s1062 = scalar_lea.hbm %s9, %s1061
          %s1064 = sshll.u32 [#allocation10], 4
          %s1065 = int_to_ptr.vmem [resolvable:$true] %s1064
          %1067 = dma.vmem_to_hbm [thread:$0]  %s1065, 128, %s1062, [#allocation9]
        $region76: #{tpu_custom_call.1} parent=47 // pred_fallthru
          _
        // Predicated region
        $region77: #{tpu_custom_call.1} parent=47 // pred_check
          %p1068 = pneg %p230
        $region78: #{tpu_custom_call.1} parent=47 // pred_check_branch
          %1070 = sbr.rel (%p1068) target = $region80
        $region79: #{tpu_custom_call.1} parent=47 // pred_region
          %1071 = dma.done [#allocation4], 128
        $region80: #{tpu_custom_call.1} parent=47 // pred_fallthru
          _
        // Predicated region
        $region81: #{tpu_custom_call.1} parent=47 // pred_check
          %p1072 = pneg %p256
        $region82: #{tpu_custom_call.1} parent=47 // pred_check_branch
          %1074 = sbr.rel (%p1072) target = $region84
        $region83: #{tpu_custom_call.1} parent=47 // pred_region
          %1075 = dma.done [#allocation9], 128
        $region84: #{tpu_custom_call.1} parent=47 // pred_fallthru
          _
        // Predicated region
        $region85: #{tpu_custom_call.1} parent=47 // pred_check
          %p1076 = pneg %p282
        $region86: #{tpu_custom_call.1} parent=47 // pred_check_branch
          %1078 = sbr.rel (%p1076) target = $region88
        $region87: #{tpu_custom_call.1} parent=47 // pred_region
          %1079 = dma.done [#allocation9], 128
        $region88: #{tpu_custom_call.1} parent=47 // pred_fallthru
          _
      $region48: #{tpu_custom_call.1} parent=5 // pred_fallthru
        _
      %p1080 = scmp.le.s32.totalorder 2, %s24
      // Predicated region
      $region89: #{tpu_custom_call.1} parent=5 // pred_check
        %p1081 = pneg %p1080
      $region90: #{tpu_custom_call.1} parent=5 // pred_check_branch
        %1083 = sbr.rel (%p1081) target = $region92
      $region91: #{tpu_custom_call.1} parent=5 // pred_region
        %s1084 = ssub.s32 %s24, 2
      $region92: #{tpu_custom_call.1} parent=5 // pred_fallthru
        _
    $region6: #{tpu_custom_call.1} parent=1 // loop_footer
      %s28 = sadd.s32 1, %s24
    $region7: #{tpu_custom_call.1} parent=1 // loop_footer_branch
      %23 = sbr.rel target = $region3
    $region8: #{tpu_custom_call.1} parent=1 // loop_exit
      _
    %1085 = vsyncpa [#allocation3], 1
    %s1086 = scalar_lea.sflag [#allocation3], 1
    %1087 = vsyncpa %s1086, 1
    %1088 = vsyncpa [#allocation6], 1
    %s1089 = scalar_lea.sflag [#allocation6], 1
    %1090 = vsyncpa %s1089, 1
    %1091 = vsyncpa [#allocation4], 1
    %s1092 = scalar_lea.sflag [#allocation4], 1
    %1093 = vsyncpa %s1092, 1
    %1094 = vsyncpa [#allocation9], 1

</llo_original>
